<compile_context>
chip_gen: v7x
topology: tpu7x:2x2x1
jax: 0.10.0
libtpu: 0.0.40
codegen_flags: <defaults>
</compile_context>

<pallas_src>
import jax
import jax.numpy as jnp
from jax.experimental import pallas as pl
from jax.experimental.pallas import tpu as pltpu


def _conv1x1_kernel(x_ref, w_ref, b_ref, o_ref):
    # x_ref: (Bb, Cin, TL), w_ref: (Cout, Cin), b_ref: (Cout, 1), o_ref: (Bb, Cout, TL)
    w = w_ref[...]
    b = b_ref[...]
    # Static (unrolled) loop over the small batch block; each element is a 2-D MXU
    # matmul with a lane-dense L slab -> no in-kernel transposes.
    for i in range(x_ref.shape[0]):
        acc = jnp.dot(w, x_ref[i], preferred_element_type=jnp.float32)
        o_ref[i] = (acc + b).astype(o_ref.dtype)


def _tpu_vmem_bytes():
    try:
        return int(pltpu.get_tpu_info().vmem_capacity_bytes)
    except Exception:
        return 64 << 20  # conservative (v7x) fallback


def _pick_tiles(B, Cin, Cout, L, dbytes, vmem_bytes):
    """Pick (batch block Bb, length tile TL) from an HBM/VMEM budget."""
    row_bytes = (Cin + Cout) * dbytes  # bytes moved per length column per batch element

    # Target ~2-4 MiB of HBM traffic per grid step (measured mem-bound kernels hit ~85%
    # of roofline at ~3 MiB/step vs ~30% at ~0.2 MiB/step), but never let the
    # double-buffered x/out working set exceed ~40% of this generation's VMEM.
    step_budget = min(4 << 20, max((vmem_bytes * 2 // 5) // 2, 1 << 20))

    # --- L tile: lane-dense (multiple of 128), prefer an even divisor of L ----------
    if L <= 128 or L * row_bytes <= step_budget:
        tl = L  # whole length in one (full-extent) tile
    else:
        tl_cap = min(max((step_budget // row_bytes) // 128 * 128, 128),
                     (L // 128) * 128)
        tl = tl_cap
        t = tl_cap
        while t >= 128:  # largest multiple of 128 <= cap that divides L (no ragged tail)
            if L % t == 0:
                tl = t
                break
            t -= 128

    # --- batch block: if one tile already covers L, raise bytes/step via Bb ---------
    bb = 1
    if tl == L and B > 1:
        want = max(int(step_budget // max(L * row_bytes, 1)), 1)
        for d in range(min(want, B), 0, -1):  # largest divisor of B <= want
            if B % d == 0:
                bb = d
                break

    # --- keep >= ~8 grid steps (>= 4 per TensorCore on v7x) when still >= ~1 MiB/step
    def steps(bb_, tl_):
        return (B // bb_) * (-(-L // tl_))

    min_step_bytes = 1 << 20
    while steps(bb, tl) < 8:
        if bb > 1 and (bb // 2) * tl * row_bytes >= min_step_bytes:
            nb = bb // 2
            while B % nb:
                nb -= 1
            bb = nb
        elif tl % 256 == 0 and bb * (tl // 2) * row_bytes >= min_step_bytes:
            tl //= 2
        else:
            break
    return bb, tl


def zero_conv1d_forward(params, x):
    """1x1 Conv1d forward.  x: (B, Cin, L) -> (B, Cout, L)."""
    w, b = params["w"], params["b"]  # w: (Cout, Cin), b: (Cout, 1)
    B, Cin, L = x.shape
    Cout = w.shape[0]

    dbytes = jnp.dtype(x.dtype).itemsize
    wbytes = jnp.dtype(w.dtype).itemsize
    vmem_cap = _tpu_vmem_bytes()

    bb, tl = _pick_tiles(B, Cin, Cout, L, dbytes, vmem_cap)
    grid = (B // bb, pl.cdiv(L, tl))

    # Explicit VMEM budget: double-buffered x/out tiles + (double-buffered, tiny)
    # resident weight/bias + headroom for compiler-internal scratch.
    tile_bytes = 2 * bb * (Cin + Cout) * tl * dbytes
    weight_bytes = 2 * (Cout * Cin + Cout) * wbytes
    vmem_limit = int(min(max(tile_bytes + weight_bytes + (4 << 20), 16 << 20),
                         int(vmem_cap * 0.9)))

    cost = pl.CostEstimate(
        flops=2 * B * Cout * Cin * L,
        transcendentals=0,
        bytes_accessed=(B * Cin * L + B * Cout * L) * dbytes
        + (Cout * Cin + Cout) * wbytes,
    )

    return pl.pallas_call(
        _conv1x1_kernel,
        out_shape=jax.ShapeDtypeStruct((B, Cout, L), x.dtype),
        grid=grid,
        in_specs=[
            pl.BlockSpec((bb, Cin, tl), lambda bi, li: (bi, 0, li)),  # x tile (lane-dense L)
            pl.BlockSpec((Cout, Cin), lambda bi, li: (0, 0)),         # resident weight
            pl.BlockSpec((Cout, 1), lambda bi, li: (0, 0)),           # resident bias
        ],
        out_specs=pl.BlockSpec((bb, Cout, tl), lambda bi, li: (bi, 0, li)),
        compiler_params=pltpu.CompilerParams(
            dimension_semantics=("parallel", "parallel"),
            vmem_limit_bytes=vmem_limit,
        ),
        cost_estimate=cost,
    )(x, w, b)


def init_zero_conv1d(in_channel, out_channel, dtype=jnp.float32):
    """Matches ZeroConv1d.__init__: conv weight and bias zero-initialized."""
    return dict(
        w=jnp.zeros((out_channel, in_channel), dtype),  # Conv1d weight (Cout, Cin, 1) squeezed
        b=jnp.zeros((out_channel, 1), dtype),           # Conv1d bias  (Cout,) as a column
    )


if __name__ == "__main__":
    B, Cin, Cout, L = 2, 16, 32, 256

    key = jax.random.PRNGKey(0)
    k_x, k_w, k_b = jax.random.split(key, 3)
    x = jax.random.normal(k_x, (B, Cin, L), dtype=jnp.float32)

    fwd = jax.jit(zero_conv1d_forward)

    # 1) Module semantics: zero-initialized 1x1 conv -> all-zero output of shape (B, Cout, L).
    params = init_zero_conv1d(Cin, Cout)
    out = fwd(params, x)
    jax.block_until_ready(out)
    assert out.shape == (B, Cout, L)
    assert bool(jnp.all(out == 0.0))

    # 2) Sanity check of the kernel math with non-zero weights vs a plain-JAX reference.
    rnd_params = dict(
        w=0.1 * jax.random.normal(k_w, (Cout, Cin), jnp.float32),
        b=0.1 * jax.random.normal(k_b, (Cout, 1), jnp.float32),
    )
    out2 = fwd(rnd_params, x)
    ref = jnp.einsum("oc,bcl->bol", rnd_params["w"], x) + rnd_params["b"][None]
    jax.block_until_ready((out2, ref))
    assert jnp.allclose(out2, ref, rtol=1e-4, atol=1e-4)

    # 3) Exercise a larger, multi-tile configuration (L tiled, batch blocked) on-device.
    B2, L2 = 4, 4096
    x2 = jax.random.normal(k_x, (B2, Cin, L2), dtype=jnp.float32)
    out3 = jax.jit(zero_conv1d_forward)(rnd_params, x2)
    ref3 = jnp.einsum("oc,bcl->bol", rnd_params["w"], x2) + rnd_params["b"][None]
    jax.block_until_ready((out3, ref3))
    assert jnp.allclose(out3, ref3, rtol=1e-4, atol=1e-4)

    print("KERNEL_OK")
</pallas_src>

<mosaic_0001>
module attributes {stable_mosaic.version = 11 : i64} {
  func.func @_conv1x1_kernel(%arg0: i32, %arg1: i32, %arg2: memref<2x16x256xf32, #tpu.memory_space<vmem>>, %arg3: memref<32x16xf32, #tpu.memory_space<vmem>>, %arg4: memref<32x1xf32, #tpu.memory_space<vmem>>, %arg5: memref<2x32x256xf32, #tpu.memory_space<vmem>>) attributes {dimension_semantics = [#tpu.dimension_semantics<parallel>, #tpu.dimension_semantics<parallel>], iteration_bounds = array<i64: 1, 1>, scalar_prefetch = 0 : i64, scratch_operands = 0 : i64, tpu.core_type = #tpu.core_type<tc>, window_params = [{transform_indices = @transform_0, window_bounds = array<i64: 2, 16, 256>}, {pipeline_mode = #tpu.pipeline_mode<synchronous>, transform_indices = @transform_1, window_bounds = array<i64: 32, 16>}, {pipeline_mode = #tpu.pipeline_mode<synchronous>, transform_indices = @transform_2, window_bounds = array<i64: 32, 1>}, {transform_indices = @transform_3, window_bounds = array<i64: 2, 32, 256>}]} {
    %c0 = arith.constant 0 : index
    %c0_0 = arith.constant 0 : index
    %0 = vector.load %arg3[%c0, %c0_0] : memref<32x16xf32, #tpu.memory_space<vmem>>, vector<32x16xf32>
    %c0_1 = arith.constant 0 : index
    %c0_2 = arith.constant 0 : index
    %1 = vector.load %arg4[%c0_1, %c0_2] : memref<32x1xf32, #tpu.memory_space<vmem>>, vector<32x1xf32>
    %c0_3 = arith.constant 0 : index
    %c0_4 = arith.constant 0 : index
    %c0_5 = arith.constant 0 : index
    %2 = vector.load %arg2[%c0_3, %c0_4, %c0_5] : memref<2x16x256xf32, #tpu.memory_space<vmem>>, vector<1x16x256xf32>
    %3 = vector.shape_cast %2 : vector<1x16x256xf32> to vector<16x256xf32>
    %cst = arith.constant dense<0.000000e+00> : vector<32x256xf32>
    %4 = tpu.matmul %0, %3, %cst {dimension_numbers = #tpu.dot_dimension_numbers<[1], [0], [0], [1], [0, 0, 1, 1], [], []>} : vector<32x16xf32>, vector<16x256xf32>, vector<32x256xf32> -> vector<32x256xf32>
    %5 = vector.broadcast %1 : vector<32x1xf32> to vector<32x256xf32>
    %6 = arith.addf %4, %5 : vector<32x256xf32>
    %c0_6 = arith.constant 0 : index
    %c0_7 = arith.constant 0 : index
    %c0_8 = arith.constant 0 : index
    %7 = vector.load %arg5[%c0_6, %c0_7, %c0_8] : memref<2x32x256xf32, #tpu.memory_space<vmem>>, vector<1x32x256xf32>
    %8 = vector.shape_cast %7 : vector<1x32x256xf32> to vector<32x256xf32>
    %9 = vector.shape_cast %6 : vector<32x256xf32> to vector<1x32x256xf32>
    tpu.vector_store %arg5[%c0_6, %c0_7, %c0_8], %9 {strides = array<i32>} : memref<2x32x256xf32, #tpu.memory_space<vmem>>, vector<1x32x256xf32>,
    %c1 = arith.constant 1 : index
    %c0_9 = arith.constant 0 : index
    %c0_10 = arith.constant 0 : index
    %10 = vector.load %arg2[%c1, %c0_9, %c0_10] : memref<2x16x256xf32, #tpu.memory_space<vmem>>, vector<1x16x256xf32>
    %11 = vector.shape_cast %10 : vector<1x16x256xf32> to vector<16x256xf32>
    %cst_11 = arith.constant dense<0.000000e+00> : vector<32x256xf32>
    %12 = tpu.matmul %0, %11, %cst_11 {dimension_numbers = #tpu.dot_dimension_numbers<[1], [0], [0], [1], [0, 0, 1, 1], [], []>} : vector<32x16xf32>, vector<16x256xf32>, vector<32x256xf32> -> vector<32x256xf32>
    %13 = vector.broadcast %1 : vector<32x1xf32> to vector<32x256xf32>
    %14 = arith.addf %12, %13 : vector<32x256xf32>
    %c1_12 = arith.constant 1 : index
    %c0_13 = arith.constant 0 : index
    %c0_14 = arith.constant 0 : index
    %15 = vector.load %arg5[%c1_12, %c0_13, %c0_14] : memref<2x32x256xf32, #tpu.memory_space<vmem>>, vector<1x32x256xf32>
    %16 = vector.shape_cast %15 : vector<1x32x256xf32> to vector<32x256xf32>
    %17 = vector.shape_cast %14 : vector<32x256xf32> to vector<1x32x256xf32>
    tpu.vector_store %arg5[%c1_12, %c0_13, %c0_14], %17 {strides = array<i32>} : memref<2x32x256xf32, #tpu.memory_space<vmem>>, vector<1x32x256xf32>,
    return
  }
  func.func @transform_0(%arg0: i32, %arg1: i32) -> (i32, i32, i32) {
    %c0_i32 = arith.constant 0 : i32
    %c0_i32_0 = arith.constant 0 : i32
    return %arg0, %c0_i32, %arg1 : i32, i32, i32
  }
  func.func @transform_1(%arg0: i32, %arg1: i32) -> (i32, i32) {
    %c0_i32 = arith.constant 0 : i32
    %c0_i32_0 = arith.constant 0 : i32
    %c0_i32_1 = arith.constant 0 : i32
    return %c0_i32, %c0_i32_0 : i32, i32
  }
  func.func @transform_2(%arg0: i32, %arg1: i32) -> (i32, i32) {
    %c0_i32 = arith.constant 0 : i32
    %c0_i32_0 = arith.constant 0 : i32
    %c0_i32_1 = arith.constant 0 : i32
    return %c0_i32, %c0_i32_0 : i32, i32
  }
  func.func @transform_3(%arg0: i32, %arg1: i32) -> (i32, i32, i32) {
    %c0_i32 = arith.constant 0 : i32
    %c0_i32_0 = arith.constant 0 : i32
    return %arg0, %c0_i32, %arg1 : i32, i32, i32
  }
}

</mosaic_0001>

<llo_original>
// kernel: zero_conv1d_forward.1
$region0: #{zero_conv1d_forward.1}
  #allocation0 [shape = 'u32[]', space=smem, size = 0x4, offset = 0x4, fixed_abs, tag = 'smem constant byte address 0x4 - core index']
  #allocation1 [shape = 'u32[144,128]{1,0:T(1,128)}', space=vmem, size = 0x12000, scoped, tag = 'internal scratch']
  %s0 = inlined_call_operand.vmem [shape: f32[2,16,256], index: 0, kind: input, shape index: {}]
  %s1 = inlined_call_operand.vmem [shape: f32[32,16], index: 1, kind: input, shape index: {}]
  %s2 = inlined_call_operand.vmem [shape: f32[32,1], index: 2, kind: input, shape index: {}]
  %s3 = inlined_call_operand.hbm [shape: f32[2,32,256], index: 3, kind: output, shape index: {}]
  %s4 = sld [smem:[#allocation0]]
  $region22: #{zero_conv1d_forward.1} parent=0
    _
  %s6 = ssub.s32 1, %s4
  %s7 = scalar_select 0, %s6, %s4
  $region1: #{zero_conv1d_forward.1} parent=0
    #allocation2 [shape = 'u8[65536]{0}', space=vmem, size = 0x10000, scoped, tag = 'output window, operand 0, single buffered']
    #allocation3 [shape = 's32[1]{0}', space=sflag, size = 0x4, scoped, tag = 'scoped memory for zero_conv1d_forward.1']
    %8 = vsyncpa [#allocation3], 0
    // Predicated region
    $region2: #{zero_conv1d_forward.1} parent=1 // pred_check
      _
    $region3: #{zero_conv1d_forward.1} parent=1 // pred_check_branch
      %10 = sbr.rel (0) target = $region5
    $region4: #{zero_conv1d_forward.1} parent=1 // pred_region
      _
    $region5: #{zero_conv1d_forward.1} parent=1 // pred_fallthru
      _
    // Predicated region
    $region6: #{zero_conv1d_forward.1} parent=1 // pred_check
      _
    $region7: #{zero_conv1d_forward.1} parent=1 // pred_check_branch
      %12 = sbr.rel (0) target = $region9
    $region8: #{zero_conv1d_forward.1} parent=1 // pred_region
      _
    $region9: #{zero_conv1d_forward.1} parent=1 // pred_fallthru
      _
    // Predicated region
    $region10: #{zero_conv1d_forward.1} parent=1 // pred_check
      _
    $region11: #{zero_conv1d_forward.1} parent=1 // pred_check_branch
      %14 = sbr.rel (0) target = $region13
    $region12: #{zero_conv1d_forward.1} parent=1 // pred_region
      _
    $region13: #{zero_conv1d_forward.1} parent=1 // pred_fallthru
      _
    %v15 = vld [vmem:[%s1] sm:$0xff]
    %v16 = vld [vmem:[%s1 + $0x8] sm:$0xff]
    %v17 = vld [vmem:[%s1 + $0x10] sm:$0xff]
    %v18 = vld [vmem:[%s1 + $0x18] sm:$0xff]
    %v19 = vld [vmem:[%s2] sm:$0xff]
    %v20 = vld [vmem:[%s2 + $0x8] sm:$0xff]
    %v21 = vld [vmem:[%s2 + $0x10] sm:$0xff]
    %v22 = vld [vmem:[%s2 + $0x18] sm:$0xff]
    %v23 = vld [vmem:[%s0] sm:$0xff]
    %v24 = vld [vmem:[%s0 + $0x8] sm:$0xff]
    %v25 = vld [vmem:[%s0 + $0x10] sm:$0xff]
    %v26 = vld [vmem:[%s0 + $0x18] sm:$0xff]
    %28 = vset.pattern.permute.xlu0 0
    %29 = vperm.xlu0 %28, %v19
    %v30 = vpop.permute.xlu0 %29
    %33 = vset.pattern.permute.xlu0 0
    %34 = vperm.xlu0 %33, %v20
    %v35 = vpop.permute.xlu0 %34
    %38 = vset.pattern.permute.xlu0 0
    %39 = vperm.xlu0 %38, %v21
    %v40 = vpop.permute.xlu0 %39
    %43 = vset.pattern.permute.xlu0 0
    %44 = vperm.xlu0 %43, %v22
    %v45 = vpop.permute.xlu0 %44
    %vm47 = vcmask 130048
    %v49 = vsel %vm47, %v15, 0
    %v52 = vsel %vm47, %v16, 0
    %v55 = vsel %vm47, %v17, 0
    %v58 = vsel %vm47, %v18, 0
    %60 = vmatprep.subr.mxu0 %v24
    %61 = vmatpush1.msra.mxu0 %v23
    %62 = vmatprep.subr.mxu0 %v26
    %63 = vmatpush1.msra.mxu0 %v25
    %64 = vmatprep.subr.mxu0 0.0
    %65 = vmatpush1.msra.mxu0 0.0
    %66 = vmatprep.subr.mxu0 0.0
    %67 = vmatpush1.msra.mxu0 0.0
    %68 = vmatprep.subr.mxu0 0.0
    %69 = vmatpush1.msra.mxu0 0.0
    %70 = vmatprep.subr.mxu0 0.0
    %71 = vmatpush1.msra.mxu0 0.0
    %72 = vmatprep.subr.mxu0 0.0
    %73 = vmatpush1.msra.mxu0 0.0
    %74 = vmatprep.subr.mxu0 0.0
    %75 = vmatpush1.msra.mxu0 0.0
    %76 = vmatprep.subr.mxu0 0.0
    %77 = vmatpush1.msra.mxu0 0.0
    %78 = vmatprep.subr.mxu0 0.0
    %79 = vmatpush1.msra.mxu0 0.0
    %80 = vmatprep.subr.mxu0 0.0
    %81 = vmatpush1.msra.mxu0 0.0
    %82 = vmatprep.subr.mxu0 0.0
    %83 = vmatpush1.msra.mxu0 0.0
    %84 = vmatprep.subr.mxu0 0.0
    %85 = vmatpush1.msra.mxu0 0.0
    %86 = vmatprep.subr.mxu0 0.0
    %87 = vmatpush1.msra.mxu0 0.0
    %88 = vmatprep.subr.mxu0 0.0
    %89 = vmatpush1.msra.mxu0 0.0
    %90 = vmatprep.subr.mxu0 0.0
    %91 = vmatpush1.msra.mxu0 0.0
    %92 = vmatprep.subr.mxu0 0.0
    %93 = vmatpush1.msra.mxu0 0.0
    %94 = vmatprep.subr.mxu0 0.0
    %95 = vmatpush1.msra.mxu0 0.0
    %96 = vmatprep.subr.mxu0 0.0
    %97 = vmatpush1.msra.mxu0 0.0
    %98 = vmatprep.subr.mxu0 0.0
    %99 = vmatpush1.msra.mxu0 0.0
    %100 = vmatprep.subr.mxu0 0.0
    %101 = vmatpush1.msra.mxu0 0.0
    %102 = vmatprep.subr.mxu0 0.0
    %103 = vmatpush1.msra.mxu0 0.0
    %104 = vmatprep.subr.mxu0 0.0
    %105 = vmatpush1.msra.mxu0 0.0
    %106 = vmatprep.subr.mxu0 0.0
    %107 = vmatpush1.msra.mxu0 0.0
    %108 = vmatprep.subr.mxu0 0.0
    %109 = vmatpush1.msra.mxu0 0.0
    %110 = vmatprep.subr.mxu0 0.0
    %111 = vmatpush1.msra.mxu0 0.0
    %112 = vmatprep.subr.mxu0 0.0
    %113 = vmatpush1.msra.mxu0 0.0
    %114 = vmatprep.subr.mxu0 0.0
    %115 = vmatpush1.msra.mxu0 0.0
    %116 = vmatprep.subr.mxu0 0.0
    %117 = vmatpush1.msra.mxu0 0.0
    %118 = vmatprep.subr.mxu0 0.0
    %119 = vmatpush1.msra.mxu0 0.0
    %120 = vmatprep.subr.mxu0 0.0
    %121 = vmatpush1.msra.mxu0 0.0
    %122 = vmatprep.subr.mxu0 0.0
    %123 = vmatpush1.msra.mxu0 0.0
    %124 = vmatprep.mubr.f32.mxu0 0.0
    %125 = vmatmul.mubr.f32.gmra.mrb[0].mxu0 %v49
    %v126 = vpop.f32.mrb[0].mxu0
    %v127 = vadd.f32 %v30, %v126
    %v128 = vpop.f32.mrb[0].mxu0
    %v129 = vadd.f32 %v30, %v128
    %130 = vmatprep.mubr.f32.mxu0 0.0
    %131 = vmatmul.mubr.f32.gmra.mrb[0].mxu0 %v52
    %v132 = vpop.f32.mrb[0].mxu0
    %v133 = vadd.f32 %v35, %v132
    %v134 = vpop.f32.mrb[0].mxu0
    %v135 = vadd.f32 %v35, %v134
    %136 = vmatprep.mubr.f32.mxu0 0.0
    %137 = vmatmul.mubr.f32.gmra.mrb[0].mxu0 %v55
    %v138 = vpop.f32.mrb[0].mxu0
    %v139 = vadd.f32 %v40, %v138
    %v140 = vpop.f32.mrb[0].mxu0
    %v141 = vadd.f32 %v40, %v140
    %142 = vmatprep.mubr.f32.mxu0 0.0
    %143 = vmatmul.mubr.f32.gmra.mrb[0].mxu0 %v58
    %v144 = vpop.f32.mrb[0].mxu0
    %v145 = vadd.f32 %v45, %v144
    %v146 = vpop.f32.mrb[0].mxu0
    %v147 = vadd.f32 %v45, %v146
    %148 = vdwg.mxu0
    %149 = vst [vmem:[#allocation2] sm:$0xff] %v127
    %150 = vst [vmem:[#allocation2 + $0x8] sm:$0xff] %v129
    %151 = vst [vmem:[#allocation2 + $0x10] sm:$0xff] %v133
    %152 = vst [vmem:[#allocation2 + $0x18] sm:$0xff] %v135
    %153 = vst [vmem:[#allocation2 + $0x20] sm:$0xff] %v139
    %154 = vst [vmem:[#allocation2 + $0x28] sm:$0xff] %v141
    %155 = vst [vmem:[#allocation2 + $0x30] sm:$0xff] %v145
    %156 = vst [vmem:[#allocation2 + $0x38] sm:$0xff] %v147
    %s157 = scalar_lea.vmem %s0, 32
    %v158 = vld [vmem:[%s157] sm:$0xff]
    %v159 = vld [vmem:[%s157 + $0x8] sm:$0xff]
    %v160 = vld [vmem:[%s157 + $0x10] sm:$0xff]
    %v161 = vld [vmem:[%s157 + $0x18] sm:$0xff]
    %162 = vmatprep.subr.mxu0 %v159
    %163 = vmatpush1.msra.mxu0 %v158
    %164 = vmatprep.subr.mxu0 %v161
    %165 = vmatpush1.msra.mxu0 %v160
    %166 = vmatprep.subr.mxu0 0.0
    %167 = vmatpush1.msra.mxu0 0.0
    %168 = vmatprep.subr.mxu0 0.0
    %169 = vmatpush1.msra.mxu0 0.0
    %170 = vmatprep.subr.mxu0 0.0
    %171 = vmatpush1.msra.mxu0 0.0
    %172 = vmatprep.subr.mxu0 0.0
    %173 = vmatpush1.msra.mxu0 0.0
    %174 = vmatprep.subr.mxu0 0.0
    %175 = vmatpush1.msra.mxu0 0.0
    %176 = vmatprep.subr.mxu0 0.0
    %177 = vmatpush1.msra.mxu0 0.0
    %178 = vmatprep.subr.mxu0 0.0
    %179 = vmatpush1.msra.mxu0 0.0
    %180 = vmatprep.subr.mxu0 0.0
    %181 = vmatpush1.msra.mxu0 0.0
    %182 = vmatprep.subr.mxu0 0.0
    %183 = vmatpush1.msra.mxu0 0.0
    %184 = vmatprep.subr.mxu0 0.0
    %185 = vmatpush1.msra.mxu0 0.0
    %186 = vmatprep.subr.mxu0 0.0
    %187 = vmatpush1.msra.mxu0 0.0
    %188 = vmatprep.subr.mxu0 0.0
    %189 = vmatpush1.msra.mxu0 0.0
    %190 = vmatprep.subr.mxu0 0.0
    %191 = vmatpush1.msra.mxu0 0.0
    %192 = vmatprep.subr.mxu0 0.0
    %193 = vmatpush1.msra.mxu0 0.0
    %194 = vmatprep.subr.mxu0 0.0
    %195 = vmatpush1.msra.mxu0 0.0
    %196 = vmatprep.subr.mxu0 0.0
    %197 = vmatpush1.msra.mxu0 0.0
    %198 = vmatprep.subr.mxu0 0.0
    %199 = vmatpush1.msra.mxu0 0.0
    %200 = vmatprep.subr.mxu0 0.0
    %201 = vmatpush1.msra.mxu0 0.0
    %202 = vmatprep.subr.mxu0 0.0
    %203 = vmatpush1.msra.mxu0 0.0
    %204 = vmatprep.subr.mxu0 0.0
    %205 = vmatpush1.msra.mxu0 0.0
    %206 = vmatprep.subr.mxu0 0.0
    %207 = vmatpush1.msra.mxu0 0.0
    %208 = vmatprep.subr.mxu0 0.0
    %209 = vmatpush1.msra.mxu0 0.0
    %210 = vmatprep.subr.mxu0 0.0
    %211 = vmatpush1.msra.mxu0 0.0
    %212 = vmatprep.subr.mxu0 0.0
    %213 = vmatpush1.msra.mxu0 0.0
    %214 = vmatprep.subr.mxu0 0.0
    %215 = vmatpush1.msra.mxu0 0.0
    %216 = vmatprep.subr.mxu0 0.0
    %217 = vmatpush1.msra.mxu0 0.0
    %218 = vmatprep.subr.mxu0 0.0
    %219 = vmatpush1.msra.mxu0 0.0
    %220 = vmatprep.subr.mxu0 0.0
    %221 = vmatpush1.msra.mxu0 0.0
    %222 = vmatprep.subr.mxu0 0.0
    %223 = vmatpush1.msra.mxu0 0.0
    %224 = vmatprep.subr.mxu0 0.0
    %225 = vmatpush1.msra.mxu0 0.0
    %226 = vmatprep.mubr.f32.mxu0 0.0
    %227 = vmatmul.mubr.f32.gmra.mrb[0].mxu0 %v49
    %v228 = vpop.f32.mrb[0].mxu0
    %v229 = vadd.f32 %v30, %v228
    %v230 = vpop.f32.mrb[0].mxu0
    %v231 = vadd.f32 %v30, %v230
    %232 = vmatprep.mubr.f32.mxu0 0.0
    %233 = vmatmul.mubr.f32.gmra.mrb[0].mxu0 %v52
    %v234 = vpop.f32.mrb[0].mxu0
    %v235 = vadd.f32 %v35, %v234
    %v236 = vpop.f32.mrb[0].mxu0
    %v237 = vadd.f32 %v35, %v236
    %238 = vmatprep.mubr.f32.mxu0 0.0
    %239 = vmatmul.mubr.f32.gmra.mrb[0].mxu0 %v55
    %v240 = vpop.f32.mrb[0].mxu0
    %v241 = vadd.f32 %v40, %v240
    %v242 = vpop.f32.mrb[0].mxu0
    %v243 = vadd.f32 %v40, %v242
    %244 = vmatprep.mubr.f32.mxu0 0.0
    %245 = vmatmul.mubr.f32.gmra.mrb[0].mxu0 %v58
    %v246 = vpop.f32.mrb[0].mxu0
    %v247 = vadd.f32 %v45, %v246
    %v248 = vpop.f32.mrb[0].mxu0
    %v249 = vadd.f32 %v45, %v248
    %250 = vdwg.mxu0
    %s251 = scalar_lea.vmem [#allocation2], 64
    %252 = vst [vmem:[%s251] sm:$0xff] %v229
    %253 = vst [vmem:[%s251 + $0x8] sm:$0xff] %v231
    %254 = vst [vmem:[%s251 + $0x10] sm:$0xff] %v235
    %255 = vst [vmem:[%s251 + $0x18] sm:$0xff] %v237
    %256 = vst [vmem:[%s251 + $0x20] sm:$0xff] %v241
    %257 = vst [vmem:[%s251 + $0x28] sm:$0xff] %v243
    %258 = vst [vmem:[%s251 + $0x30] sm:$0xff] %v247
    %259 = vst [vmem:[%s251 + $0x38] sm:$0xff] %v249
    // Predicated region
    $region14: #{zero_conv1d_forward.1} parent=1 // pred_check
      _
    $region15: #{zero_conv1d_forward.1} parent=1 // pred_check_branch
      %261 = sbr.rel (0) target = $region17
    $region16: #{zero_conv1d_forward.1} parent=1 // pred_region
      %s263 = ssub.s32 2048, 2048
      %264 = vsyncadd [#allocation3], %s263
      %s265 = sshll.u32 [#allocation2], 4
      %s266 = int_to_ptr.vmem [resolvable:$true] %s265
      %271 = dma.vmem_to_hbm [thread:$0]  %s266, 2048, %s3, [#allocation3], 256, 256, 16
    $region17: #{zero_conv1d_forward.1} parent=1 // pred_fallthru
      _
    // Predicated region
    $region18: #{zero_conv1d_forward.1} parent=1 // pred_check
      _
    $region19: #{zero_conv1d_forward.1} parent=1 // pred_check_branch
      %273 = sbr.rel (0) target = $region21
    $region20: #{zero_conv1d_forward.1} parent=1 // pred_region
      %274 = dma.done [#allocation3], 2048
    $region21: #{zero_conv1d_forward.1} parent=1 // pred_fallthru
      _
    %275 = vsyncpa [#allocation3], 1

</llo_original>
